<compile_context>
chip_gen: v5e
topology: v5e:2x2
jax: 0.10.0
libtpu: 0.0.40
codegen_flags: <defaults>
</compile_context>

<pallas_src>
import functools
import math

import jax
import jax.numpy as jnp
from jax.experimental import pallas as pl
from jax.experimental.pallas import tpu as pltpu

_MiB = 1024 * 1024
_EPS = 1e-4
_LOG_EPS = math.log(_EPS)
_LOG_1M_EPS = math.log(1.0 - _EPS)
# Conservative count of live (tr, tc) f32 temporaries inside the focal kernel,
# used when sizing tiles so Mosaic's materialized intermediates fit VMEM too.
_FOCAL_LIVE_F32 = 8


# ----------------------------------------------------------------------------
# Per-generation VMEM budgeting.
# ----------------------------------------------------------------------------
def _vmem_capacity_bytes():
    try:
        info = pltpu.get_tpu_info()
        for name in ("vmem_capacity_bytes", "vmem_size_bytes", "vmem_bytes"):
            val = getattr(info, name, None)
            if val:
                return int(val)
    except Exception:
        pass
    return 64 * _MiB  # conservative default (v7x per-TensorCore VMEM)


def _vmem_budget():
    cap = _vmem_capacity_bytes()
    limit = min(110 * _MiB, max(cap - 16 * _MiB, 16 * _MiB))
    budget = max(limit - 16 * _MiB, 8 * _MiB)
    return budget, limit


# ----------------------------------------------------------------------------
# Focal loss kernel: 2-D grid over (row tiles, HW tiles) of the (B*C, HW) maps.
# Two input streams only; per-tile partial sums to lane-dense VMEM outputs.
# ----------------------------------------------------------------------------
def _focal_kernel(pred_ref, gt_ref, pos_out_ref, neg_out_ref, npos_out_ref):
    x = pred_ref[...].astype(jnp.float32)     # logits
    gt = gt_ref[...].astype(jnp.float32)

    # Default ctdet invariants: pos = (gt == 1), neg = 1 - pos, w = 1.
    pos_mask = (gt >= 1.0).astype(jnp.float32)
    neg_mask = 1.0 - pos_mask

    # Stable softplus(-x) = log(1 + exp(-x)); reuse exp(-|x|) for everything.
    ax = jnp.abs(x)
    t = jnp.exp(-ax)                                   # exp(-|x|) in (0, 1]
    sp_neg = jnp.maximum(-x, 0.0) + jnp.log(1.0 + t)   # softplus(-x)

    # log(clip(sigmoid(x))) and log(1 - clip(sigmoid(x))).
    log_pred = jnp.clip(-sp_neg, _LOG_EPS, _LOG_1M_EPS)
    log_1m_pred = jnp.clip(-x - sp_neg, _LOG_EPS, _LOG_1M_EPS)

    inv = 1.0 / (1.0 + t)
    pred = jnp.where(x >= 0.0, inv, 1.0 - inv)          # sigmoid(x)
    pred = jnp.clip(pred, _EPS, 1.0 - _EPS)

    omg = 1.0 - gt
    neg_w = omg * omg
    neg_w = neg_w * neg_w                               # (1 - gt)^4

    pos_term = log_pred * jnp.square(1.0 - pred) * pos_mask
    neg_term = log_1m_pred * jnp.square(pred) * neg_w * neg_mask

    pos_s = jnp.sum(pos_term)
    neg_s = jnp.sum(neg_term)
    np_s = jnp.sum(pos_mask)

    pos_out_ref[...] = jnp.full(pos_out_ref.shape, pos_s, jnp.float32)
    neg_out_ref[...] = jnp.full(neg_out_ref.shape, neg_s, jnp.float32)
    npos_out_ref[...] = jnp.full(npos_out_ref.shape, np_s, jnp.float32)


def _pick_focal_tiles(rows, hw, bytes_per_elem, budget_bytes):
    """Pick (tr, tc) so tr|rows, tc|hw, layout-friendly, fitting the budget."""
    def fits(tr, tc):
        return tr * tc * bytes_per_elem <= budget_bytes

    row_cands = sorted({rows} | {d for d in range(8, rows + 1, 8) if rows % d == 0})
    col_cands = sorted({hw} | {d for d in range(128, hw + 1, 128) if hw % d == 0})

    # Prefer full-width row tiles (contiguous DMAs); only tile HW if needed.
    for tr in sorted(row_cands, reverse=True):
        if fits(tr, hw):
            return tr, hw
    tr_min = min(row_cands)
    for tc in sorted(col_cands, reverse=True):
        if fits(tr_min, tc):
            return tr_min, tc
    raise ValueError(
        "focal-loss tile search failed: no (row, col) tile of "
        f"({rows}, {hw}) fits the {budget_bytes}-byte VMEM budget")


def _focal_loss_call(pred2d, gt2d):
    rows, hw = pred2d.shape
    budget, limit = _vmem_budget()
    # Per element: two double-buffered input streams + live f32 temporaries.
    bytes_per_elem = (2 * (pred2d.dtype.itemsize + gt2d.dtype.itemsize)
                      + 4 * _FOCAL_LIVE_F32)
    tr, tc = _pick_focal_tiles(rows, hw, bytes_per_elem, budget)
    nr, nc = rows // tr, hw // tc

    in_spec = pl.BlockSpec((tr, tc), lambda i, j: (i, j))
    out_spec = pl.BlockSpec((1, 1, 8, 128), lambda i, j: (i, j, 0, 0))
    out_sds = jax.ShapeDtypeStruct((nr, nc, 8, 128), jnp.float32)

    pos_p, neg_p, np_p = pl.pallas_call(
        _focal_kernel,
        grid=(nr, nc),
        in_specs=[in_spec, in_spec],
        out_specs=(out_spec, out_spec, out_spec),
        out_shape=(out_sds, out_sds, out_sds),
        compiler_params=pltpu.CompilerParams(
            dimension_semantics=("parallel", "parallel"),
            vmem_limit_bytes=limit),
    )(pred2d, gt2d)

    pos_sum = jnp.sum(pos_p[:, :, 0, 0])
    neg_sum = jnp.sum(neg_p[:, :, 0, 0])
    num_pos = jnp.sum(np_p[:, :, 0, 0])
    return jnp.where(num_pos > 0.0,
                     -(pos_sum + neg_sum) / jnp.maximum(num_pos, 1.0),
                     -neg_sum)


# ----------------------------------------------------------------------------
# RegL1 kernel for the 'wh' + 'reg' heads.
#   Features arrive in the free layout (B, c*S, 128) (S = HW/128): element
#   [b, c*S + p//128, p%128] == head[b, c, p].  Per object k the gather is a
#   (K, S) one-hot MXU matmul over the 128-wide block + a lane one-hot select.
#   A batch tile of `bt` elements is processed per grid step (in-kernel fori),
#   per-step partial sums go to lane-dense outputs and are reduced on the host
#   side of the kernel boundary.
# ----------------------------------------------------------------------------
def _regl1_kernel(cw, cr, ind_ref, mask_ref, wh_ref, reg_ref,
                  wh_tgt_ref, reg_tgt_ref, wh_out_ref, off_out_ref, msk_out_ref):
    bt = ind_ref.shape[0]
    K = ind_ref.shape[1]
    S = wh_ref.shape[1] // cw

    def body(i, carry):
        wh_acc, off_acc, m_acc = carry

        ind_col = ind_ref[i]                            # (K, 1) int32
        msk_col = mask_ref[i].astype(jnp.float32)       # (K, 1)

        sub = ind_col // 128                            # (K, 1) block index
        lane = ind_col - sub * 128                      # (K, 1) lane index

        s_iota = jax.lax.broadcasted_iota(jnp.int32, (K, S), 1)
        g_sub = (s_iota == sub).astype(jnp.float32)     # (K, S) block one-hot
        l_iota = jax.lax.broadcasted_iota(jnp.int32, (K, 128), 1)
        g_lane = (l_iota == lane).astype(jnp.float32)   # (K, 128) lane one-hot
        sel = g_lane * msk_col                          # masked lane select

        def head_sum(feat_ref, tgt_ref, c_count):
            feat = feat_ref[i].astype(jnp.float32)      # (c_count*S, 128)
            tgt = tgt_ref[i].astype(jnp.float32)        # (K, c_count)
            acc = jnp.zeros((), jnp.float32)
            for c in range(c_count):                    # static channel loop
                block = feat[c * S:(c + 1) * S, :]      # (S, 128)
                gathered = jnp.dot(
                    g_sub, block,
                    preferred_element_type=jnp.float32,
                    precision=jax.lax.Precision.HIGHEST)     # (K, 128)
                diff = jnp.abs(gathered - tgt[:, c:c + 1]) * sel
                acc = acc + jnp.sum(diff)
            return acc

        wh_acc = wh_acc + head_sum(wh_ref, wh_tgt_ref, cw)
        off_acc = off_acc + head_sum(reg_ref, reg_tgt_ref, cr)
        m_acc = m_acc + jnp.sum(msk_col)
        return wh_acc, off_acc, m_acc

    init = (jnp.zeros((), jnp.float32),
            jnp.zeros((), jnp.float32),
            jnp.zeros((), jnp.float32))
    wh_s, off_s, m_s = jax.lax.fori_loop(0, bt, body, init)

    wh_out_ref[...] = jnp.full(wh_out_ref.shape, wh_s, jnp.float32)
    off_out_ref[...] = jnp.full(off_out_ref.shape, off_s, jnp.float32)
    msk_out_ref[...] = jnp.full(msk_out_ref.shape, m_s, jnp.float32)


def _pick_batch_tile(B, per_elem_bytes, budget_bytes):
    best = 1
    for bt in range(1, B + 1):
        if B % bt == 0 and 2 * bt * per_elem_bytes <= budget_bytes:
            best = bt
    return best


def _regl1_call(ind3, mask3, wh2, reg2, wh_tgt, reg_tgt, cw, cr):
    B, K, _ = ind3.shape
    S = wh2.shape[1] // cw
    budget, limit = _vmem_budget()

    per_elem = ((cw + cr) * S * 128 * wh2.dtype.itemsize
                + K * (2 + cw + cr) * 4)
    bt = _pick_batch_tile(B, per_elem, min(budget // 2, 32 * _MiB))
    nsteps = B // bt

    out_spec = pl.BlockSpec((1, 8, 128), lambda b: (b, 0, 0))
    out_sds = jax.ShapeDtypeStruct((nsteps, 8, 128), jnp.float32)

    outs = pl.pallas_call(
        functools.partial(_regl1_kernel, cw, cr),
        grid=(nsteps,),
        in_specs=[
            pl.BlockSpec((bt, K, 1), lambda b: (b, 0, 0)),        # ind
            pl.BlockSpec((bt, K, 1), lambda b: (b, 0, 0)),        # reg_mask
            pl.BlockSpec((bt, cw * S, 128), lambda b: (b, 0, 0)),  # wh feat
            pl.BlockSpec((bt, cr * S, 128), lambda b: (b, 0, 0)),  # reg feat
            pl.BlockSpec((bt, K, cw), lambda b: (b, 0, 0)),        # wh target
            pl.BlockSpec((bt, K, cr), lambda b: (b, 0, 0)),        # reg target
        ],
        out_specs=(out_spec, out_spec, out_spec),
        out_shape=(out_sds, out_sds, out_sds),
        compiler_params=pltpu.CompilerParams(
            dimension_semantics=("parallel",),
            vmem_limit_bytes=limit),
    )(ind3, mask3, wh2, reg2, wh_tgt, reg_tgt)

    wh_num = jnp.sum(outs[0][:, 0, 0])
    off_num = jnp.sum(outs[1][:, 0, 0])
    m_sum = jnp.sum(outs[2][:, 0, 0])
    wh_loss = wh_num / (m_sum * float(cw) + 1e-4)
    off_loss = off_num / (m_sum * float(cr) + 1e-4)
    return wh_loss, off_loss


# ----------------------------------------------------------------------------
# CtdetLoss.forward
# ----------------------------------------------------------------------------
def ctdet_loss(outputs, batch, opt):
    """JAX/Pallas equivalent of CtdetLoss.forward (FocalLoss + RegL1 path)."""
    if opt.get('mse_loss', False):
        raise NotImplementedError("TODO(synk): opt.mse_loss branch not implemented")
    if opt.get('reg_loss', 'l1') != 'l1':
        raise NotImplementedError("TODO(synk): 'sl1' RegLoss branch not implemented")
    if opt.get('dense_wh', False) or opt.get('norm_wh', False) or opt.get('cat_spec_wh', False):
        raise NotImplementedError("TODO(synk): dense/norm/cat_spec wh branches not implemented")

    num_stacks = opt['num_stacks']
    B, C, H, W = batch['hm'].shape
    HW = H * W

    # NOTE: the focal kernel derives hm_pos == (hm >= 1), hm_neg == 1 - hm_pos
    # and hm_w == 1 in-kernel (default ctdet invariants), so only the logits and
    # the ground-truth heatmap are streamed from HBM (native dtype, no copies).
    gt2d = batch['hm'].reshape(B * C, HW)

    ind3 = batch['ind'].astype(jnp.int32)[:, :, None]      # (B, K, 1)
    mask3 = batch['reg_mask'][:, :, None]                  # (B, K, 1)
    cw = batch['wh'].shape[-1]
    cr = batch['reg'].shape[-1]

    S = (HW + 127) // 128
    HW_pad = S * 128

    def to_blocks(x, c):
        # (B, c, H, W) -> (B, c*S, 128); free when HW is a multiple of 128.
        if HW_pad == HW:
            return x.reshape(B, c * S, 128)
        xp = jnp.pad(x.reshape(B, c, HW), ((0, 0), (0, 0), (0, HW_pad - HW)))
        return xp.reshape(B, c * S, 128)

    hm_loss, wh_loss, off_loss = 0.0, 0.0, 0.0
    for s in range(num_stacks):
        output = outputs[s]

        hm_l = _focal_loss_call(output['hm'].reshape(B * C, HW), gt2d)
        hm_loss = hm_loss + hm_l / num_stacks

        need_wh = opt['wh_weight'] > 0
        need_off = opt['reg_offset'] and opt['off_weight'] > 0
        if need_wh or need_off:
            wh2 = to_blocks(output['wh'], cw)
            reg2 = to_blocks(output['reg'], cr)
            wh_l, off_l = _regl1_call(ind3, mask3, wh2, reg2,
                                      batch['wh'], batch['reg'], cw, cr)
            if need_wh:
                wh_loss = wh_loss + wh_l / num_stacks
            if need_off:
                off_loss = off_loss + off_l / num_stacks

    loss = (opt['hm_weight'] * hm_loss
            + opt['wh_weight'] * wh_loss
            + opt['off_weight'] * off_loss)
    loss_stats = {'loss': loss, 'hm_loss': hm_loss,
                  'wh_loss': wh_loss, 'off_loss': off_loss}
    return loss, loss_stats


# ----------------------------------------------------------------------------
# Pure-JAX reference (in-script correctness check only).
# ----------------------------------------------------------------------------
def _reference_loss(outputs, batch, opt):
    num_stacks = opt['num_stacks']
    hm_loss, wh_loss, off_loss = 0.0, 0.0, 0.0
    mask = batch['reg_mask'][:, :, None].astype(jnp.float32)
    for s in range(num_stacks):
        out = outputs[s]
        pred = jnp.clip(jax.nn.sigmoid(out['hm']), 1e-4, 1.0 - 1e-4)
        gt, w = batch['hm'], batch['hm_w']
        neg, pos = batch['hm_neg'], batch['hm_pos']
        neg_w = (1.0 - gt) ** 4
        pos_term = jnp.log(pred) * (1.0 - pred) ** 2 * pos * w
        neg_term = jnp.log(1.0 - pred) * pred ** 2 * neg_w * neg * w
        num_pos = jnp.sum(pos)
        hm_l = jnp.where(num_pos > 0,
                         -(jnp.sum(pos_term) + jnp.sum(neg_term))
                         / jnp.maximum(num_pos, 1.0),
                         -jnp.sum(neg_term))

        def gather(feat):
            B, C, H, W = feat.shape
            f = feat.reshape(B, C, H * W).transpose(0, 2, 1)    # (B, HW, C)
            idx = batch['ind'][:, :, None].astype(jnp.int32)
            idx = jnp.broadcast_to(idx, (B, idx.shape[1], C))
            return jnp.take_along_axis(f, idx, axis=1)          # (B, K, C)

        def regl1(feat, tgt):
            p = gather(feat)
            num = jnp.sum(jnp.abs(p * mask - tgt * mask))
            den = jnp.sum(batch['reg_mask']) * tgt.shape[-1] + 1e-4
            return num / den

        hm_loss = hm_loss + hm_l / num_stacks
        wh_loss = wh_loss + regl1(out['wh'], batch['wh']) / num_stacks
        off_loss = off_loss + regl1(out['reg'], batch['reg']) / num_stacks
    loss = (opt['hm_weight'] * hm_loss + opt['wh_weight'] * wh_loss
            + opt['off_weight'] * off_loss)
    return loss, {'loss': loss, 'hm_loss': hm_loss,
                  'wh_loss': wh_loss, 'off_loss': off_loss}


if __name__ == "__main__":
    key = jax.random.PRNGKey(0)
    B, C, H, W, K = 2, 4, 16, 16, 8
    ks = jax.random.split(key, 8)

    # model outputs (single stack)
    hm_out = jax.random.normal(ks[0], (B, C, H, W), jnp.float32)
    wh_out = jax.random.normal(ks[1], (B, 2, H, W), jnp.float32)
    reg_out = jax.random.normal(ks[2], (B, 2, H, W), jnp.float32)
    outputs = [{'hm': hm_out, 'wh': wh_out, 'reg': reg_out}]

    # ground-truth batch (default ctdet invariants: pos=(gt==1), neg=1-pos, w=1)
    hm_gt = jax.random.uniform(ks[3], (B, C, H, W), jnp.float32, 0.0, 0.95)
    hm_gt = hm_gt.at[:, :, 4, 4].set(1.0)              # plant exact peaks
    hm_pos = (hm_gt >= 1.0).astype(jnp.float32)
    hm_neg = 1.0 - hm_pos
    hm_w = jnp.ones_like(hm_gt)

    ind = jax.random.randint(ks[4], (B, K), 0, H * W).astype(jnp.int32)
    reg_mask = (jax.lax.broadcasted_iota(jnp.int32, (B, K), 1) < 5).astype(jnp.float32)
    wh_tgt = jax.random.uniform(ks[5], (B, K, 2), jnp.float32, 0.0, 8.0)
    reg_tgt = jax.random.uniform(ks[6], (B, K, 2), jnp.float32, 0.0, 1.0)

    batch = {'hm': hm_gt, 'hm_w': hm_w, 'hm_neg': hm_neg, 'hm_pos': hm_pos,
             'reg_mask': reg_mask, 'ind': ind, 'wh': wh_tgt, 'reg': reg_tgt}

    opt = dict(num_stacks=1, mse_loss=False, reg_loss='l1', dense_wh=False,
               norm_wh=False, cat_spec_wh=False, reg_offset=True,
               hm_weight=1.0, wh_weight=0.1, off_weight=1.0)

    loss, stats = ctdet_loss(outputs, batch, opt)
    jax.block_until_ready(loss)
    assert jnp.isfinite(loss)

    ref_loss, ref_stats = _reference_loss(outputs, batch, opt)
    for name in ('loss', 'hm_loss', 'wh_loss', 'off_loss'):
        assert jnp.allclose(stats[name], ref_stats[name], rtol=5e-3, atol=5e-3), (
            name, stats[name], ref_stats[name])

    print("KERNEL_OK")
</pallas_src>

<mosaic_0001>
module attributes {stable_mosaic.version = 11 : i64} {
  func.func @_focal_kernel(%arg0: i32, %arg1: i32, %arg2: memref<8x256xf32, #tpu.memory_space<vmem>>, %arg3: memref<8x256xf32, #tpu.memory_space<vmem>>, %arg4: memref<1x1x8x128xf32, #tpu.memory_space<vmem>>, %arg5: memref<1x1x8x128xf32, #tpu.memory_space<vmem>>, %arg6: memref<1x1x8x128xf32, #tpu.memory_space<vmem>>) attributes {dimension_semantics = [#tpu.dimension_semantics<parallel>, #tpu.dimension_semantics<parallel>], iteration_bounds = array<i64: 1, 1>, scalar_prefetch = 0 : i64, scratch_operands = 0 : i64, tpu.core_type = #tpu.core_type<tc>, window_params = [{transform_indices = @transform_0, window_bounds = array<i64: 8, 256>}, {transform_indices = @transform_1, window_bounds = array<i64: 8, 256>}, {transform_indices = @transform_2, window_bounds = array<i64: 1, 1, 8, 128>}, {transform_indices = @transform_3, window_bounds = array<i64: 1, 1, 8, 128>}, {transform_indices = @transform_4, window_bounds = array<i64: 1, 1, 8, 128>}]} {
    %c0 = arith.constant 0 : index
    %c0_0 = arith.constant 0 : index
    %0 = vector.load %arg2[%c0, %c0_0] : memref<8x256xf32, #tpu.memory_space<vmem>>, vector<8x256xf32>
    %c0_1 = arith.constant 0 : index
    %c0_2 = arith.constant 0 : index
    %1 = vector.load %arg3[%c0_1, %c0_2] : memref<8x256xf32, #tpu.memory_space<vmem>>, vector<8x256xf32>
    %cst = arith.constant 1.000000e+00 : f32
    %2 = vector.broadcast %cst : f32 to vector<8x256xf32>
    %3 = arith.cmpf oge, %1, %2 : vector<8x256xf32>
    %4 = arith.extui %3 : vector<8x256xi1> to vector<8x256xi32>
    %5 = arith.sitofp %4 : vector<8x256xi32> to vector<8x256xf32>
    %cst_3 = arith.constant 1.000000e+00 : f32
    %6 = vector.broadcast %cst_3 : f32 to vector<8x256xf32>
    %7 = arith.subf %6, %5 : vector<8x256xf32>
    %8 = math.absf %0 : vector<8x256xf32>
    %cst_4 = arith.constant 0.000000e+00 : f32
    %9 = vector.broadcast %cst_4 : f32 to vector<8x256xf32>
    %10 = arith.subf %9, %8 : vector<8x256xf32>
    %11 = math.exp %10 : vector<8x256xf32>
    %cst_5 = arith.constant 0.000000e+00 : f32
    %12 = vector.broadcast %cst_5 : f32 to vector<8x256xf32>
    %13 = arith.subf %12, %0 : vector<8x256xf32>
    %cst_6 = arith.constant 0.000000e+00 : f32
    %14 = vector.broadcast %cst_6 : f32 to vector<8x256xf32>
    %15 = arith.maximumf %13, %14 : vector<8x256xf32>
    %cst_7 = arith.constant 1.000000e+00 : f32
    %16 = vector.broadcast %cst_7 : f32 to vector<8x256xf32>
    %17 = arith.addf %16, %11 : vector<8x256xf32>
    %18 = math.log %17 : vector<8x256xf32>
    %19 = arith.addf %15, %18 : vector<8x256xf32>
    %cst_8 = arith.constant 0.000000e+00 : f32
    %20 = vector.broadcast %cst_8 : f32 to vector<8x256xf32>
    %21 = arith.subf %20, %19 : vector<8x256xf32>
    %cst_9 = arith.constant -9.21034049 : f32
    %cst_10 = arith.constant -1.000050e-04 : f32
    %22 = vector.broadcast %cst_9 : f32 to vector<8x256xf32>
    %23 = arith.maximumf %22, %21 : vector<8x256xf32>
    %24 = vector.broadcast %cst_10 : f32 to vector<8x256xf32>
    %25 = arith.minimumf %24, %23 : vector<8x256xf32>
    %cst_11 = arith.constant 0.000000e+00 : f32
    %26 = vector.broadcast %cst_11 : f32 to vector<8x256xf32>
    %27 = arith.subf %26, %0 : vector<8x256xf32>
    %28 = arith.subf %27, %19 : vector<8x256xf32>
    %cst_12 = arith.constant -9.21034049 : f32
    %cst_13 = arith.constant -1.000050e-04 : f32
    %29 = vector.broadcast %cst_12 : f32 to vector<8x256xf32>
    %30 = arith.maximumf %29, %28 : vector<8x256xf32>
    %31 = vector.broadcast %cst_13 : f32 to vector<8x256xf32>
    %32 = arith.minimumf %31, %30 : vector<8x256xf32>
    %cst_14 = arith.constant 1.000000e+00 : f32
    %33 = vector.broadcast %cst_14 : f32 to vector<8x256xf32>
    %34 = arith.addf %33, %11 : vector<8x256xf32>
    %cst_15 = arith.constant 1.000000e+00 : f32
    %35 = vector.broadcast %cst_15 : f32 to vector<8x256xf32>
    %36 = arith.divf %35, %34 : vector<8x256xf32>
    %cst_16 = arith.constant 0.000000e+00 : f32
    %37 = vector.broadcast %cst_16 : f32 to vector<8x256xf32>
    %38 = arith.cmpf oge, %0, %37 : vector<8x256xf32>
    %cst_17 = arith.constant 1.000000e+00 : f32
    %39 = vector.broadcast %cst_17 : f32 to vector<8x256xf32>
    %40 = arith.subf %39, %36 : vector<8x256xf32>
    %41 = arith.select %38, %36, %40 : vector<8x256xi1>, vector<8x256xf32>
    %cst_18 = arith.constant 9.99999974E-5 : f32
    %cst_19 = arith.constant 0.999899983 : f32
    %42 = vector.broadcast %cst_18 : f32 to vector<8x256xf32>
    %43 = arith.maximumf %42, %41 : vector<8x256xf32>
    %44 = vector.broadcast %cst_19 : f32 to vector<8x256xf32>
    %45 = arith.minimumf %44, %43 : vector<8x256xf32>
    %cst_20 = arith.constant 1.000000e+00 : f32
    %46 = vector.broadcast %cst_20 : f32 to vector<8x256xf32>
    %47 = arith.subf %46, %1 : vector<8x256xf32>
    %48 = arith.mulf %47, %47 : vector<8x256xf32>
    %49 = arith.mulf %48, %48 : vector<8x256xf32>
    %cst_21 = arith.constant 1.000000e+00 : f32
    %50 = vector.broadcast %cst_21 : f32 to vector<8x256xf32>
    %51 = arith.subf %50, %45 : vector<8x256xf32>
    %52 = arith.mulf %51, %51 : vector<8x256xf32>
    %53 = arith.mulf %25, %52 : vector<8x256xf32>
    %54 = arith.mulf %53, %5 : vector<8x256xf32>
    %55 = arith.mulf %45, %45 : vector<8x256xf32>
    %56 = arith.mulf %32, %55 : vector<8x256xf32>
    %57 = arith.mulf %56, %49 : vector<8x256xf32>
    %58 = arith.mulf %57, %7 : vector<8x256xf32>
    %59 = vector.shape_cast %54 : vector<8x256xf32> to vector<1x8x256xf32>
    %cst_22 = arith.constant dense<0.000000e+00> : vector<1xf32>
    %60 = vector.multi_reduction <add>, %59, %cst_22 [1, 2] : vector<1x8x256xf32> to vector<1xf32>
    %61 = vector.shape_cast %60 : vector<1xf32> to vector<1x1x1xf32>
    %62 = vector.extract %61[0, 0, 0] : f32 from vector<1x1x1xf32>
    %63 = vector.shape_cast %58 : vector<8x256xf32> to vector<1x8x256xf32>
    %cst_23 = arith.constant dense<0.000000e+00> : vector<1xf32>
    %64 = vector.multi_reduction <add>, %63, %cst_23 [1, 2] : vector<1x8x256xf32> to vector<1xf32>
    %65 = vector.shape_cast %64 : vector<1xf32> to vector<1x1x1xf32>
    %66 = vector.extract %65[0, 0, 0] : f32 from vector<1x1x1xf32>
    %67 = vector.shape_cast %5 : vector<8x256xf32> to vector<1x8x256xf32>
    %cst_24 = arith.constant dense<0.000000e+00> : vector<1xf32>
    %68 = vector.multi_reduction <add>, %67, %cst_24 [1, 2] : vector<1x8x256xf32> to vector<1xf32>
    %69 = vector.shape_cast %68 : vector<1xf32> to vector<1x1x1xf32>
    %70 = vector.extract %69[0, 0, 0] : f32 from vector<1x1x1xf32>
    %71 = vector.broadcast %62 : f32 to vector<1x1x8x128xf32>
    %c0_25 = arith.constant 0 : index
    %c0_26 = arith.constant 0 : index
    %c0_27 = arith.constant 0 : index
    %c0_28 = arith.constant 0 : index
    %72 = vector.load %arg4[%c0_25, %c0_26, %c0_27, %c0_28] : memref<1x1x8x128xf32, #tpu.memory_space<vmem>>, vector<1x1x8x128xf32>
    tpu.vector_store %arg4[%c0_25, %c0_26, %c0_27, %c0_28], %71 {strides = array<i32>} : memref<1x1x8x128xf32, #tpu.memory_space<vmem>>, vector<1x1x8x128xf32>,
    %73 = vector.broadcast %66 : f32 to vector<1x1x8x128xf32>
    %c0_29 = arith.constant 0 : index
    %c0_30 = arith.constant 0 : index
    %c0_31 = arith.constant 0 : index
    %c0_32 = arith.constant 0 : index
    %74 = vector.load %arg5[%c0_29, %c0_30, %c0_31, %c0_32] : memref<1x1x8x128xf32, #tpu.memory_space<vmem>>, vector<1x1x8x128xf32>
    tpu.vector_store %arg5[%c0_29, %c0_30, %c0_31, %c0_32], %73 {strides = array<i32>} : memref<1x1x8x128xf32, #tpu.memory_space<vmem>>, vector<1x1x8x128xf32>,
    %75 = vector.broadcast %70 : f32 to vector<1x1x8x128xf32>
    %c0_33 = arith.constant 0 : index
    %c0_34 = arith.constant 0 : index
    %c0_35 = arith.constant 0 : index
    %c0_36 = arith.constant 0 : index
    %76 = vector.load %arg6[%c0_33, %c0_34, %c0_35, %c0_36] : memref<1x1x8x128xf32, #tpu.memory_space<vmem>>, vector<1x1x8x128xf32>
    tpu.vector_store %arg6[%c0_33, %c0_34, %c0_35, %c0_36], %75 {strides = array<i32>} : memref<1x1x8x128xf32, #tpu.memory_space<vmem>>, vector<1x1x8x128xf32>,
    return
  }
  func.func @transform_0(%arg0: i32, %arg1: i32) -> (i32, i32) {
    %c0_i32 = arith.constant 0 : i32
    return %arg0, %arg1 : i32, i32
  }
  func.func @transform_1(%arg0: i32, %arg1: i32) -> (i32, i32) {
    %c0_i32 = arith.constant 0 : i32
    return %arg0, %arg1 : i32, i32
  }
  func.func @transform_2(%arg0: i32, %arg1: i32) -> (i32, i32, i32, i32) {
    %c0_i32 = arith.constant 0 : i32
    %c0_i32_0 = arith.constant 0 : i32
    %c0_i32_1 = arith.constant 0 : i32
    return %arg0, %arg1, %c0_i32, %c0_i32_0 : i32, i32, i32, i32
  }
  func.func @transform_3(%arg0: i32, %arg1: i32) -> (i32, i32, i32, i32) {
    %c0_i32 = arith.constant 0 : i32
    %c0_i32_0 = arith.constant 0 : i32
    %c0_i32_1 = arith.constant 0 : i32
    return %arg0, %arg1, %c0_i32, %c0_i32_0 : i32, i32, i32, i32
  }
  func.func @transform_4(%arg0: i32, %arg1: i32) -> (i32, i32, i32, i32) {
    %c0_i32 = arith.constant 0 : i32
    %c0_i32_0 = arith.constant 0 : i32
    %c0_i32_1 = arith.constant 0 : i32
    return %arg0, %arg1, %c0_i32, %c0_i32_0 : i32, i32, i32, i32
  }
}

</mosaic_0001>

<llo_original>
// kernel: tpu_custom_call.1
$region0: #{tpu_custom_call.1}
  #allocation0 [shape = 'u32[]', space=smem, size = 0x4, offset = 0x4, fixed_abs, tag = 'smem constant byte address 0x4 - core index']
  #allocation1 [shape = 'u32[72,128]{1,0:T(1,128)}', space=vmem, size = 0x9000, scoped, tag = 'internal scratch']
  %s0 = inlined_call_operand.hbm [shape: f32[8,256], index: 0, kind: input, shape index: {}]
  %s1 = inlined_call_operand.hbm [shape: f32[8,256], index: 1, kind: input, shape index: {}]
  %s2 = inlined_call_operand.hbm [shape: f32[1,1,8,128], index: 2, kind: output, shape index: {0}]
  %s3 = inlined_call_operand.hbm [shape: f32[1,1,8,128], index: 3, kind: output, shape index: {1}]
  %s4 = inlined_call_operand.hbm [shape: f32[1,1,8,128], index: 4, kind: output, shape index: {2}]
  %5 = xla_tuple %s2, %s3, %s4
  %s6 = sld [smem:[#allocation0]]
  $region42: #{tpu_custom_call.1} parent=0
    _
  %s8 = ssub.s32 1, %s6
  %s9 = scalar_select 0, %s8, %s6
  $region1: #{tpu_custom_call.1} parent=0
    #allocation2 [shape = 'u8[8192]{0}', space=vmem, size = 0x2000, scoped, tag = 'input window, operand 0, single buffered']
    #allocation3 [shape = 's32[1]{0}', space=sflag, size = 0x4, scoped, tag = 'scoped memory for tpu_custom_call.1']
    #allocation4 [shape = 's32[1]{0}', space=sflag, size = 0x4, scoped, tag = 'scoped memory for tpu_custom_call.1']
    #allocation5 [shape = 'u8[8192]{0}', space=vmem, size = 0x2000, scoped, tag = 'input window, operand 1, single buffered']
    #allocation6 [shape = 's32[1]{0}', space=sflag, size = 0x4, scoped, tag = 'scoped memory for tpu_custom_call.1']
    #allocation7 [shape = 'u8[4096]{0}', space=vmem, size = 0x1000, scoped, tag = 'output window, operand 0, single buffered']
    #allocation8 [shape = 'u8[4096]{0}', space=vmem, size = 0x1000, scoped, tag = 'output window, operand 1, single buffered']
    #allocation9 [shape = 's32[1]{0}', space=sflag, size = 0x4, scoped, tag = 'scoped memory for tpu_custom_call.1']
    #allocation10 [shape = 'u8[4096]{0}', space=vmem, size = 0x1000, scoped, tag = 'output window, operand 2, single buffered']
    %10 = vsyncpa [#allocation3], 0
    %11 = vsyncpa [#allocation6], 0
    %12 = vsyncpa [#allocation4], 0
    %13 = vsyncpa [#allocation9], 0
    // Predicated region
    $region2: #{tpu_custom_call.1} parent=1 // pred_check
      _
    $region3: #{tpu_custom_call.1} parent=1 // pred_check_branch
      %15 = sbr.rel (0) target = $region5
    $region4: #{tpu_custom_call.1} parent=1 // pred_region
      %17 = vsyncadd [#allocation3], 0
      %s19 = sshll.u32 %s0, 4
      %s20 = int_to_ptr.hbm [resolvable:$true] %s19
      %s21 = sshll.u32 [#allocation2], 4
      %s22 = int_to_ptr.vmem [resolvable:$true] %s21
      %24 = dma.hbm_to_vmem [thread:$0]  %s20, 256, %s22, [#allocation3]
    $region5: #{tpu_custom_call.1} parent=1 // pred_fallthru
      _
    // Predicated region
    $region6: #{tpu_custom_call.1} parent=1 // pred_check
      _
    $region7: #{tpu_custom_call.1} parent=1 // pred_check_branch
      %26 = sbr.rel (0) target = $region9
    $region8: #{tpu_custom_call.1} parent=1 // pred_region
      %28 = vsyncadd [#allocation6], 0
      %s30 = sshll.u32 %s1, 4
      %s31 = int_to_ptr.hbm [resolvable:$true] %s30
      %s32 = sshll.u32 [#allocation5], 4
      %s33 = int_to_ptr.vmem [resolvable:$true] %s32
      %35 = dma.hbm_to_vmem [thread:$0]  %s31, 256, %s33, [#allocation6]
    $region9: #{tpu_custom_call.1} parent=1 // pred_fallthru
      _
    // Predicated region
    $region10: #{tpu_custom_call.1} parent=1 // pred_check
      _
    $region11: #{tpu_custom_call.1} parent=1 // pred_check_branch
      %37 = sbr.rel (0) target = $region13
    $region12: #{tpu_custom_call.1} parent=1 // pred_region
      %39 = dma.done [#allocation3], 256
    $region13: #{tpu_custom_call.1} parent=1 // pred_fallthru
      _
    // Predicated region
    $region14: #{tpu_custom_call.1} parent=1 // pred_check
      _
    $region15: #{tpu_custom_call.1} parent=1 // pred_check_branch
      %41 = sbr.rel (0) target = $region17
    $region16: #{tpu_custom_call.1} parent=1 // pred_region
      %43 = dma.done [#allocation6], 256
    $region17: #{tpu_custom_call.1} parent=1 // pred_fallthru
      _
    %v44 = vld [vmem:[#allocation2] sm:$0xff]
    %v45 = vld [vmem:[#allocation2 + $0x8] sm:$0xff]
    %v46 = vld [vmem:[#allocation5] sm:$0xff]
    %v47 = vld [vmem:[#allocation5 + $0x8] sm:$0xff]
    %vm48 = vcmp.ge.f32.partialorder %v46, 1.0
    %vm49 = vcmp.ge.f32.partialorder %v47, 1.0
    %v50 = vsel %vm48, 1, 0
    %v51 = vsel %vm49, 1, 0
    %v52 = vcvt.s32.f32 %v50
    %v53 = vcvt.s32.f32 %v51
    %v54 = vsub.f32 1.0, %v52
    %v55 = vsub.f32 1.0, %v53
    %v56 = vand.u32 2147483647, %v44
    %v57 = vand.u32 2147483647, %v45
    %v58 = vsub.f32 0.0, %v56
    %v59 = vsub.f32 0.0, %v57
    %v60 = vmul.f32 %v58, 1.442695
    %v61 = vpow.pop %v60
    %v62 = vmul.f32 %v59, 1.442695
    %v63 = vpow.pop %v62
    %v64 = vsub.f32 0.0, %v44
    %v65 = vsub.f32 0.0, %v45
    %v66 = vmax.f32 %v64, 0.0
    %v67 = vmax.f32 %v65, 0.0
    %v68 = vadd.f32 %v61, 1.0
    %v69 = vadd.f32 %v63, 1.0
    %v70 = vlog2.pop %v68
    %v71 = vmul.f32 %v70, 0.6931472
    %v72 = vlog2.pop %v69
    %v73 = vmul.f32 %v72, 0.6931472
    %v74 = vadd.f32 %v66, %v71
    %v75 = vadd.f32 %v67, %v73
    %v76 = vsub.f32 0.0, %v74
    %v77 = vsub.f32 0.0, %v75
    %v78 = vmax.f32 %v76, -9.2103405
    %v79 = vmax.f32 %v77, -9.2103405
    %v80 = vmin.f32 %v78, -0.000100005
    %v81 = vmin.f32 %v79, -0.000100005
    %v82 = vsub.f32 %v64, %v74
    %v83 = vsub.f32 %v65, %v75
    %v84 = vmax.f32 %v82, -9.2103405
    %v85 = vmax.f32 %v83, -9.2103405
    %v86 = vmin.f32 %v84, -0.000100005
    %v87 = vmin.f32 %v85, -0.000100005
    %v88 = vrcp.pop %v68
    %v89 = vmul.f32 %v68, %v88
    %v90 = vsub.f32 1.0, %v89
    %v91 = vmul.f32 %v88, %v90
    %v92 = vadd.f32 %v88, %v91
    %vm93 = vweird.f32 %v68
    %vm94 = vweird.f32 %v88
    %vm95 = vmor %vm93, %vm94
    %v96 = vsel %vm95, %v88, %v92
    %v97 = vand.u32 2147483647, %v68
    %vm98 = vcmp.eq.f32.partialorder %v97, 8.507059e+37
    %v99 = vand.u32 %v68, 2147483648
    %v100 = vor.u32 1.1754944e-38, %v99
    %v101 = vsel %vm98, %v100, %v96
    %v102 = vmul.f32 1.0, %v101
    %v103 = vrcp.pop %v69
    %v104 = vmul.f32 %v69, %v103
    %v105 = vsub.f32 1.0, %v104
    %v106 = vmul.f32 %v103, %v105
    %v107 = vadd.f32 %v103, %v106
    %vm108 = vweird.f32 %v69
    %vm109 = vweird.f32 %v103
    %vm110 = vmor %vm108, %vm109
    %v111 = vsel %vm110, %v103, %v107
    %v112 = vand.u32 2147483647, %v69
    %vm113 = vcmp.eq.f32.partialorder %v112, 8.507059e+37
    %v114 = vand.u32 %v69, 2147483648
    %v115 = vor.u32 1.1754944e-38, %v114
    %v116 = vsel %vm113, %v115, %v111
    %v117 = vmul.f32 1.0, %v116
    %vm118 = vcmp.ge.f32.partialorder %v44, 0.0
    %vm119 = vcmp.ge.f32.partialorder %v45, 0.0
    %v120 = vsub.f32 1.0, %v102
    %v121 = vsub.f32 1.0, %v117
    %v122 = vsel %vm118, %v102, %v120
    %v123 = vsel %vm119, %v117, %v121
    %v124 = vmax.f32 %v122, 0.0001
    %v125 = vmax.f32 %v123, 0.0001
    %v126 = vmin.f32 %v124, 0.9999
    %v127 = vmin.f32 %v125, 0.9999
    %v128 = vsub.f32 1.0, %v46
    %v129 = vsub.f32 1.0, %v47
    %v130 = vmul.f32 %v128, %v128
    %v131 = vmul.f32 %v129, %v129
    %v132 = vmul.f32 %v130, %v130
    %v133 = vmul.f32 %v131, %v131
    %v134 = vsub.f32 1.0, %v126
    %v135 = vsub.f32 1.0, %v127
    %v136 = vmul.f32 %v134, %v134
    %v137 = vmul.f32 %v135, %v135
    %v138 = vmul.f32 %v80, %v136
    %v139 = vmul.f32 %v81, %v137
    %v140 = vmul.f32 %v138, %v52
    %v141 = vmul.f32 %v139, %v53
    %v142 = vmul.f32 %v126, %v126
    %v143 = vmul.f32 %v127, %v127
    %v144 = vmul.f32 %v86, %v142
    %v145 = vmul.f32 %v87, %v143
    %v146 = vmul.f32 %v144, %v132
    %v147 = vmul.f32 %v145, %v133
    %v148 = vmul.f32 %v146, %v54
    %v149 = vmul.f32 %v147, %v55
    %v150 = vadd.f32 %v140, %v141
    %151 = vadd.xlane.f32.xlu0 %v150
    %v152 = vpop.xlane.xlu0 %151
    %v153 = vrot.slane %v152, 4
    %v154 = vadd.f32 %v152, %v153
    %v155 = vrot.slane %v154, 2
    %v156 = vadd.f32 %v154, %v155
    %v157 = vrot.slane %v156, 1
    %v158 = vadd.f32 %v156, %v157
    %s159 = vtos %v158
    %v160 = vadd.f32 %v148, %v149
    %161 = vadd.xlane.f32.xlu0 %v160
    %v162 = vpop.xlane.xlu0 %161
    %v163 = vrot.slane %v162, 4
    %v164 = vadd.f32 %v162, %v163
    %v165 = vrot.slane %v164, 2
    %v166 = vadd.f32 %v164, %v165
    %v167 = vrot.slane %v166, 1
    %v168 = vadd.f32 %v166, %v167
    %s169 = vtos %v168
    %v170 = vadd.f32 %v52, %v53
    %171 = vadd.xlane.f32.xlu0 %v170
    %v172 = vpop.xlane.xlu0 %171
    %v173 = vrot.slane %v172, 4
    %v174 = vadd.f32 %v172, %v173
    %v175 = vrot.slane %v174, 2
    %v176 = vadd.f32 %v174, %v175
    %v177 = vrot.slane %v176, 1
    %v178 = vadd.f32 %v176, %v177
    %s179 = vtos %v178
    %v180 = vstv %s159
    %181 = vst [vmem:[#allocation7] sm:$0xff] %v180
    %v182 = vstv %s169
    %183 = vst [vmem:[#allocation8] sm:$0xff] %v182
    %v184 = vstv %s179
    %185 = vst [vmem:[#allocation10] sm:$0xff] %v184
    // Predicated region
    $region18: #{tpu_custom_call.1} parent=1 // pred_check
      _
    $region19: #{tpu_custom_call.1} parent=1 // pred_check_branch
      %187 = sbr.rel (0) target = $region21
    $region20: #{tpu_custom_call.1} parent=1 // pred_region
      %189 = vsyncadd [#allocation4], 0
      %s191 = sshll.u32 [#allocation7], 4
      %s192 = int_to_ptr.vmem [resolvable:$true] %s191
      %s193 = sshll.u32 %s2, 4
      %s194 = int_to_ptr.hbm [resolvable:$true] %s193
      %196 = dma.vmem_to_hbm [thread:$0]  %s192, 128, %s194, [#allocation4]
    $region21: #{tpu_custom_call.1} parent=1 // pred_fallthru
      _
    // Predicated region
    $region22: #{tpu_custom_call.1} parent=1 // pred_check
      _
    $region23: #{tpu_custom_call.1} parent=1 // pred_check_branch
      %198 = sbr.rel (0) target = $region25
    $region24: #{tpu_custom_call.1} parent=1 // pred_region
      %200 = vsyncadd [#allocation9], 0
      %s202 = sshll.u32 [#allocation8], 4
      %s203 = int_to_ptr.vmem [resolvable:$true] %s202
      %s204 = sshll.u32 %s3, 4
      %s205 = int_to_ptr.hbm [resolvable:$true] %s204
      %207 = dma.vmem_to_hbm [thread:$0]  %s203, 128, %s205, [#allocation9]
    $region25: #{tpu_custom_call.1} parent=1 // pred_fallthru
      _
    // Predicated region
    $region26: #{tpu_custom_call.1} parent=1 // pred_check
      _
    $region27: #{tpu_custom_call.1} parent=1 // pred_check_branch
      %209 = sbr.rel (0) target = $region29
    $region28: #{tpu_custom_call.1} parent=1 // pred_region
      %211 = vsyncadd [#allocation9], 0
      %s213 = sshll.u32 [#allocation10], 4
      %s214 = int_to_ptr.vmem [resolvable:$true] %s213
      %s215 = sshll.u32 %s4, 4
      %s216 = int_to_ptr.hbm [resolvable:$true] %s215
      %218 = dma.vmem_to_hbm [thread:$0]  %s214, 128, %s216, [#allocation9]
    $region29: #{tpu_custom_call.1} parent=1 // pred_fallthru
      _
    // Predicated region
    $region30: #{tpu_custom_call.1} parent=1 // pred_check
      _
    $region31: #{tpu_custom_call.1} parent=1 // pred_check_branch
      %220 = sbr.rel (0) target = $region33
    $region32: #{tpu_custom_call.1} parent=1 // pred_region
      %222 = dma.done [#allocation4], 128
    $region33: #{tpu_custom_call.1} parent=1 // pred_fallthru
      _
    // Predicated region
    $region34: #{tpu_custom_call.1} parent=1 // pred_check
      _
    $region35: #{tpu_custom_call.1} parent=1 // pred_check_branch
      %224 = sbr.rel (0) target = $region37
    $region36: #{tpu_custom_call.1} parent=1 // pred_region
      %226 = dma.done [#allocation9], 128
    $region37: #{tpu_custom_call.1} parent=1 // pred_fallthru
      _
    // Predicated region
    $region38: #{tpu_custom_call.1} parent=1 // pred_check
      _
    $region39: #{tpu_custom_call.1} parent=1 // pred_check_branch
      %228 = sbr.rel (0) target = $region41
    $region40: #{tpu_custom_call.1} parent=1 // pred_region
      %230 = dma.done [#allocation9], 128
    $region41: #{tpu_custom_call.1} parent=1 // pred_fallthru
      _
    %231 = vsyncpa [#allocation3], 1
    %232 = vsyncpa [#allocation6], 1
    %233 = vsyncpa [#allocation4], 1
    %234 = vsyncpa [#allocation9], 1

</llo_original>
